<compile_context>
chip_gen: v5e
topology: v5e:2x2
jax: 0.10.0
libtpu: 0.0.40
codegen_flags: <defaults>
</compile_context>

<pallas_src>
import jax
import jax.numpy as jnp
from jax.experimental import pallas as pl
from jax.experimental.pallas import tpu as pltpu


def _rbf_kernel(coeff_ref, x_ref, o_ref):
    # coeff_ref: (1, 1) SMEM scalar holding -0.5 / lengthscale**2.
    # x_ref / o_ref: (block_rows, lanes) VMEM tiles. Pure elementwise.
    o_ref[...] = jnp.exp(x_ref[...] * coeff_ref[0, 0]).astype(o_ref.dtype)


def rbf_forward(scale, lengthscale):
    """scale: array of any shape. lengthscale: scalar parameter."""
    orig_shape = scale.shape
    orig_dtype = scale.dtype

    flat = scale.reshape(-1)
    n = flat.shape[0]

    # Precompute the scalar coefficient once (matches scale / ls**2 * -0.5).
    coeff = (-0.5 / (jnp.asarray(lengthscale, dtype=jnp.float32) ** 2)).reshape(1, 1)

    # Fast path: widest lane width (multiple of 128) that divides n exactly.
    lanes = None
    for cand in (1024, 512, 256, 128):
        if n % cand == 0:
            lanes = cand
            break

    if lanes is not None:
        x2d = flat.reshape(n // lanes, lanes)      # free reshape, no copy
        needs_slice = False
    else:
        # Ragged tail: pad only up to the next multiple of 128 lanes.
        lanes = 128
        n_pad = -(-n // lanes) * lanes
        x2d = jnp.pad(flat, (0, n_pad - n)).reshape(n_pad // lanes, lanes)
        needs_slice = True

    rows = x2d.shape[0]

    # ~2 MiB per block so 4 in-flight buffers fit the default scoped VMEM
    # limit on every generation (16 MiB v5e, 32 MiB v6e/v7x).
    bytes_per_elem = jnp.dtype(orig_dtype).itemsize
    target_rows = max(8, (2 * 1024 * 1024) // (lanes * bytes_per_elem))
    target_rows = (target_rows // 8) * 8           # sublane-aligned
    block_rows = rows if rows <= target_rows else target_rows

    grid = (pl.cdiv(rows, block_rows),)

    out2d = pl.pallas_call(
        _rbf_kernel,
        out_shape=jax.ShapeDtypeStruct((rows, lanes), orig_dtype),
        grid_spec=pl.GridSpec(
            grid=grid,
            in_specs=[
                pl.BlockSpec(memory_space=pltpu.SMEM),               # coeff
                pl.BlockSpec((block_rows, lanes), lambda i: (i, 0)),  # x tile
            ],
            out_specs=pl.BlockSpec((block_rows, lanes), lambda i: (i, 0)),
        ),
        compiler_params=pltpu.CompilerParams(
            dimension_semantics=("parallel",),
        ),
    )(coeff, x2d)

    if needs_slice:
        out = out2d.reshape(-1)[:n].reshape(orig_shape)
    else:
        out = out2d.reshape(orig_shape)
    return out


if __name__ == "__main__":
    key = jax.random.PRNGKey(0)

    # Deterministic parameter init, matching RBF.__init__: lengthscale = 3.0
    lengthscale = jnp.float32(3.0)

    # Example "scale" input, small NCHW shape.
    x = jax.random.uniform(key, (2, 4, 16, 16), dtype=jnp.float32) * 4.0

    out = rbf_forward(x, lengthscale)
    out = jax.block_until_ready(out)

    # Reference check in plain JAX.
    ref = jnp.exp(x / (lengthscale ** 2) * -0.5)
    assert out.shape == x.shape and out.dtype == x.dtype
    assert jnp.allclose(out, ref, atol=1e-6, rtol=1e-6), "mismatch vs reference"

    print("KERNEL_OK")
</pallas_src>

<mosaic_0001>
module attributes {stable_mosaic.version = 11 : i64} {
  func.func @_rbf_kernel(%arg0: i32, %arg1: memref<1x1xf32, #tpu.memory_space<smem>>, %arg2: memref<2x1024xf32, #tpu.memory_space<vmem>>, %arg3: memref<2x1024xf32, #tpu.memory_space<vmem>>) attributes {dimension_semantics = [#tpu.dimension_semantics<parallel>], iteration_bounds = array<i64: 1>, scalar_prefetch = 0 : i64, scratch_operands = 0 : i64, tpu.core_type = #tpu.core_type<tc>, window_params = [{transform_indices = @transform_0, window_bounds = array<i64: 1, 1>}, {transform_indices = @transform_1, window_bounds = array<i64: 2, 1024>}, {transform_indices = @transform_2, window_bounds = array<i64: 2, 1024>}]} {
    %c0 = arith.constant 0 : index
    %c0_0 = arith.constant 0 : index
    %0 = vector.load %arg2[%c0, %c0_0] : memref<2x1024xf32, #tpu.memory_space<vmem>>, vector<2x1024xf32>
    %c0_1 = arith.constant 0 : index
    %c0_2 = arith.constant 0 : index
    %1 = memref.load %arg1[%c0_1, %c0_2] : memref<1x1xf32, #tpu.memory_space<smem>>
    %2 = vector.broadcast %1 : f32 to vector<2x1024xf32>
    %3 = arith.mulf %0, %2 : vector<2x1024xf32>
    %4 = math.exp %3 : vector<2x1024xf32>
    %c0_3 = arith.constant 0 : index
    %c0_4 = arith.constant 0 : index
    %5 = vector.load %arg3[%c0_3, %c0_4] : memref<2x1024xf32, #tpu.memory_space<vmem>>, vector<2x1024xf32>
    tpu.vector_store %arg3[%c0_3, %c0_4], %4 {strides = array<i32>} : memref<2x1024xf32, #tpu.memory_space<vmem>>, vector<2x1024xf32>,
    return
  }
  func.func @transform_0(%arg0: i32) -> (i32, i32) {
    %c0_i32 = arith.constant 0 : i32
    %c0_i32_0 = arith.constant 0 : i32
    %c0_i32_1 = arith.constant 0 : i32
    return %c0_i32, %c0_i32_0 : i32, i32
  }
  func.func @transform_1(%arg0: i32) -> (i32, i32) {
    %c0_i32 = arith.constant 0 : i32
    %c0_i32_0 = arith.constant 0 : i32
    return %arg0, %c0_i32 : i32, i32
  }
  func.func @transform_2(%arg0: i32) -> (i32, i32) {
    %c0_i32 = arith.constant 0 : i32
    %c0_i32_0 = arith.constant 0 : i32
    return %arg0, %c0_i32 : i32, i32
  }
}

</mosaic_0001>

<llo_original>
// kernel: tpu_custom_call.1
$region0: #{tpu_custom_call.1}
  #allocation0 [shape = 'u32[]', space=smem, size = 0x4, offset = 0x4, fixed_abs, tag = 'smem constant byte address 0x4 - core index']
  #allocation1 [shape = 'u32[72,128]{1,0:T(1,128)}', space=vmem, size = 0x9000, scoped, tag = 'internal scratch']
  #allocation2 [shape = 'f32[1,1]{1,0:T(1,128)S(6)}', space=smem, size = 0x200, scoped, tag = 'scoped memory for tpu_custom_call.1']
  %s0 = inlined_call_operand.<no memory space> [shape: f32[1,1], index: 0, kind: input, shape index: {}]
  %s1 = inlined_call_operand.hbm [shape: f32[2,1024], index: 1, kind: input, shape index: {}]
  %s2 = inlined_call_operand.hbm [shape: f32[2,1024], index: 2, kind: output, shape index: {}]
  %s3 = sld [smem:[#allocation0]]
  $region22: #{tpu_custom_call.1} parent=0
    _
  %s5 = ssub.s32 1, %s3
  %s6 = scalar_select 0, %s5, %s3
  %7 = sst [smem:[#allocation2]] %s0
  $region1: #{tpu_custom_call.1} parent=0
    #allocation3 [shape = 'u8[8192]{0}', space=vmem, size = 0x2000, scoped, tag = 'input window, operand 1, single buffered']
    #allocation4 [shape = 's32[1]{0}', space=sflag, size = 0x4, scoped, tag = 'scoped memory for tpu_custom_call.1']
    #allocation5 [shape = 's32[1]{0}', space=sflag, size = 0x4, scoped, tag = 'scoped memory for tpu_custom_call.1']
    #allocation6 [shape = 'u8[8192]{0}', space=vmem, size = 0x2000, scoped, tag = 'output window, operand 0, single buffered']
    %8 = vsyncpa [#allocation4], 0
    %9 = vsyncpa [#allocation5], 0
    // Predicated region
    $region2: #{tpu_custom_call.1} parent=1 // pred_check
      _
    $region3: #{tpu_custom_call.1} parent=1 // pred_check_branch
      %11 = sbr.rel (0) target = $region5
    $region4: #{tpu_custom_call.1} parent=1 // pred_region
      _
    $region5: #{tpu_custom_call.1} parent=1 // pred_fallthru
      _
    // Predicated region
    $region6: #{tpu_custom_call.1} parent=1 // pred_check
      _
    $region7: #{tpu_custom_call.1} parent=1 // pred_check_branch
      %13 = sbr.rel (0) target = $region9
    $region8: #{tpu_custom_call.1} parent=1 // pred_region
      %15 = vsyncadd [#allocation4], 0
      %s17 = sshll.u32 %s1, 4
      %s18 = int_to_ptr.hbm [resolvable:$true] %s17
      %s19 = sshll.u32 [#allocation3], 4
      %s20 = int_to_ptr.vmem [resolvable:$true] %s19
      %22 = dma.hbm_to_vmem [thread:$0]  %s18, 256, %s20, [#allocation4]
    $region9: #{tpu_custom_call.1} parent=1 // pred_fallthru
      _
    // Predicated region
    $region10: #{tpu_custom_call.1} parent=1 // pred_check
      _
    $region11: #{tpu_custom_call.1} parent=1 // pred_check_branch
      %24 = sbr.rel (0) target = $region13
    $region12: #{tpu_custom_call.1} parent=1 // pred_region
      %26 = dma.done [#allocation4], 256
    $region13: #{tpu_custom_call.1} parent=1 // pred_fallthru
      _
    %v27 = vld [vmem:[#allocation3] sm:$0xff]
    %v28 = vld [vmem:[#allocation3 + $0x8] sm:$0xff]
    %s29 = sld [smem:[#allocation2]]
    %v30 = vstv %s29
    %v31 = vmul.f32 %v27, %v30
    %v32 = vmul.f32 %v28, %v30
    %v33 = vmul.f32 %v31, 1.442695
    %v34 = vpow.pop %v33
    %v35 = vmul.f32 %v32, 1.442695
    %v36 = vpow.pop %v35
    %37 = vst [vmem:[#allocation6] sm:$0xff] %v34
    %38 = vst [vmem:[#allocation6 + $0x8] sm:$0xff] %v36
    // Predicated region
    $region14: #{tpu_custom_call.1} parent=1 // pred_check
      _
    $region15: #{tpu_custom_call.1} parent=1 // pred_check_branch
      %40 = sbr.rel (0) target = $region17
    $region16: #{tpu_custom_call.1} parent=1 // pred_region
      %42 = vsyncadd [#allocation5], 0
      %s44 = sshll.u32 [#allocation6], 4
      %s45 = int_to_ptr.vmem [resolvable:$true] %s44
      %s46 = sshll.u32 %s2, 4
      %s47 = int_to_ptr.hbm [resolvable:$true] %s46
      %49 = dma.vmem_to_hbm [thread:$0]  %s45, 256, %s47, [#allocation5]
    $region17: #{tpu_custom_call.1} parent=1 // pred_fallthru
      _
    // Predicated region
    $region18: #{tpu_custom_call.1} parent=1 // pred_check
      _
    $region19: #{tpu_custom_call.1} parent=1 // pred_check_branch
      %51 = sbr.rel (0) target = $region21
    $region20: #{tpu_custom_call.1} parent=1 // pred_region
      %53 = dma.done [#allocation5], 256
    $region21: #{tpu_custom_call.1} parent=1 // pred_fallthru
      _
    %54 = vsyncpa [#allocation4], 1
    %55 = vsyncpa [#allocation5], 1

</llo_original>
